<compile_context>
chip_gen: v7x
topology: tpu7x:2x2x1
jax: 0.10.0
libtpu: 0.0.40
codegen_flags: <defaults>
</compile_context>

<pallas_src>
import functools

import jax
import jax.numpy as jnp
from jax.experimental import pallas as pl
from jax.experimental.pallas import tpu as pltpu


# ---------------------------------------------------------------------------
# Kernels
# ---------------------------------------------------------------------------
def _add_kernel(x1_ref, x2_ref, o_ref):
    # Pure bandwidth-bound elementwise add: compute in the inputs' native
    # (promoted) dtype, no f32 upcast (v6e/v7x VPU handles bf16 directly).
    o_ref[...] = (x1_ref[...] + x2_ref[...]).astype(o_ref.dtype)


def _quant_add_kernel(x1_ref, x2_ref, o_ref, *, bits: int):
    # Add in f32 for the reduction / rounding accuracy.
    out = x1_ref[...].astype(jnp.float32) + x2_ref[...].astype(jnp.float32)

    qmax = float(2 ** (bits - 1) - 1)   # 127 for 8 bits
    qmin = -float(2 ** (bits - 1))      # -128

    absmax = jnp.max(jnp.abs(out), axis=-1, keepdims=True)   # per-token
    scale = absmax / qmax
    safe_scale = jnp.where(scale > 0.0, scale, jnp.ones_like(scale))
    # One reciprocal per row (EUP) + broadcast multiply instead of a
    # per-element divide. approx=False keeps bit-exactness vs. x/scale
    # (approx=True would be fine if 1-LSB quantization differences were OK).
    inv = pl.reciprocal(safe_scale, approx=False)
    q = jnp.clip(jnp.round(out * inv), qmin, qmax)
    # All-zero rows round-trip to zero, so no extra select is needed.
    o_ref[...] = (q * safe_scale).astype(o_ref.dtype)


# ---------------------------------------------------------------------------
# Tile-size selection
# ---------------------------------------------------------------------------
def _vmem_capacity_bytes() -> int:
    try:
        return int(pltpu.get_tpu_info().vmem_capacity_bytes)
    except Exception:
        return 64 * 1024 * 1024   # conservative (v7x per-TC VMEM)


def _pick_row_block(n_rows: int, lane: int, itemsize: int, budget_bytes: int) -> int:
    # Double-buffered x1/x2/out tiles + headroom for f32 intermediates.
    per_row = lane * (2 * 3 * itemsize + 8)
    rb = max(1, budget_bytes // per_row)
    rb = min(rb, n_rows)
    if rb == n_rows:
        return int(rb)                 # full-extent block is always legal
    if rb >= 8:
        rb = (rb // 8) * 8             # keep sublane-aligned tiles
    elif n_rows >= 8:
        rb = 8
    else:
        rb = n_rows
    return int(rb)


def _plain_layout(total: int, rows: int, last: int):
    # Lane-dense flattening for the elementwise-only path.
    for c in (8192, 4096, 2048, 1024, 512, 256, 128):
        if total % c == 0:
            return total // c, c
    return rows, last   # fallback: keep the original 2D view


# ---------------------------------------------------------------------------
# Wrapper
# ---------------------------------------------------------------------------
def quant_add(x1, x2, *, use_act_quant: bool = False, bits: int = 8):
    """Pallas implementation of QuantAdd.forward.

    x1, x2: arrays of identical shape (..., H). Quantization (if enabled) is
    per-token, i.e. per row of the flattened (..., H) view.
    """
    assert x1.shape == x2.shape, "QuantAdd requires matching shapes"
    orig_shape = x1.shape
    H = orig_shape[-1]
    R = 1
    for d in orig_shape[:-1]:
        R *= d
    total = R * H

    out_dtype = jnp.result_type(x1.dtype, x2.dtype)
    itemsize = max(jnp.dtype(x1.dtype).itemsize,
                   jnp.dtype(x2.dtype).itemsize,
                   jnp.dtype(out_dtype).itemsize)

    # VMEM-aware tiling.
    vmem_cap = _vmem_capacity_bytes()
    vmem_limit = (vmem_cap * 3) // 4          # scoped limit we request
    tile_budget = (vmem_limit * 4) // 5       # leave headroom

    if use_act_quant:
        # Per-token reduction -> keep the hidden axis whole on each row.
        rows, lane = R, H
        kernel = functools.partial(_quant_add_kernel, bits=bits)
        transcendentals = rows
    else:
        # Pure elementwise: flatten to a lane-dense layout (multiple of 128).
        rows, lane = _plain_layout(total, R, H)
        kernel = _add_kernel
        transcendentals = 0

    row_block = _pick_row_block(rows, lane, itemsize, tile_budget)
    grid = (pl.cdiv(rows, row_block),)

    x1f = x1.reshape(rows, lane)
    x2f = x2.reshape(rows, lane)

    spec = pl.BlockSpec((row_block, lane), lambda i: (i, 0))

    out = pl.pallas_call(
        kernel,
        out_shape=jax.ShapeDtypeStruct((rows, lane), out_dtype),
        grid=grid,
        in_specs=[spec, spec],
        out_specs=spec,
        compiler_params=pltpu.CompilerParams(
            dimension_semantics=("parallel",),   # shards across v7x's 2 TCs
            vmem_limit_bytes=int(vmem_limit),
        ),
        cost_estimate=pl.CostEstimate(
            flops=total,
            transcendentals=transcendentals,
            bytes_accessed=3 * total * itemsize,
        ),
    )(x1f, x2f)

    return out.reshape(orig_shape)


# ---------------------------------------------------------------------------
# Reference (pure JAX)
# ---------------------------------------------------------------------------
def _reference(x1, x2, use_act_quant, bits=8):
    out_dtype = jnp.result_type(x1.dtype, x2.dtype)
    out = x1 + x2
    if use_act_quant:
        out = out.astype(jnp.float32)
        qmax = float(2 ** (bits - 1) - 1)
        qmin = -float(2 ** (bits - 1))
        absmax = jnp.max(jnp.abs(out), axis=-1, keepdims=True)
        scale = absmax / qmax
        safe_scale = jnp.where(scale > 0.0, scale, jnp.ones_like(scale))
        q = jnp.clip(jnp.round(out * (1.0 / safe_scale)), qmin, qmax)
        out = q * safe_scale
    return out.astype(out_dtype)


if __name__ == "__main__":
    key = jax.random.PRNGKey(0)
    k1, k2 = jax.random.split(key)

    B, T, H = 2, 8, 32  # batch, seq, hidden (small test shapes)
    x1 = jax.random.normal(k1, (B, T, H), dtype=jnp.float32)
    x2 = jax.random.normal(k2, (B, T, H), dtype=jnp.float32)

    # Default module behavior: use_act_quant = False (plain add).
    out_plain = jax.block_until_ready(quant_add(x1, x2, use_act_quant=False))
    ref_plain = _reference(x1, x2, use_act_quant=False)
    assert out_plain.shape == ref_plain.shape
    assert jnp.allclose(out_plain, ref_plain, atol=1e-6), "plain add mismatch"

    # Quantized path (use_act_quant = True): fused per-token fake quant.
    out_q = jax.block_until_ready(quant_add(x1, x2, use_act_quant=True))
    ref_q = _reference(x1, x2, use_act_quant=True)
    assert out_q.shape == ref_q.shape
    assert jnp.allclose(out_q, ref_q, atol=1e-5), "quantized add mismatch"

    print("KERNEL_OK")
</pallas_src>

<mosaic_0001>
module attributes {stable_mosaic.version = 11 : i64} {
  func.func @_add_kernel(%arg0: i32, %arg1: memref<1x512xf32, #tpu.memory_space<vmem>>, %arg2: memref<1x512xf32, #tpu.memory_space<vmem>>, %arg3: memref<1x512xf32, #tpu.memory_space<vmem>>) attributes {dimension_semantics = [#tpu.dimension_semantics<parallel>], iteration_bounds = array<i64: 1>, scalar_prefetch = 0 : i64, scratch_operands = 0 : i64, tpu.core_type = #tpu.core_type<tc>, window_params = [{transform_indices = @transform_0, window_bounds = array<i64: 1, 512>}, {transform_indices = @transform_1, window_bounds = array<i64: 1, 512>}, {transform_indices = @transform_2, window_bounds = array<i64: 1, 512>}]} {
    %c0 = arith.constant 0 : index
    %c0_0 = arith.constant 0 : index
    %0 = vector.load %arg1[%c0, %c0_0] : memref<1x512xf32, #tpu.memory_space<vmem>>, vector<1x512xf32>
    %c0_1 = arith.constant 0 : index
    %c0_2 = arith.constant 0 : index
    %1 = vector.load %arg2[%c0_1, %c0_2] : memref<1x512xf32, #tpu.memory_space<vmem>>, vector<1x512xf32>
    %2 = arith.addf %0, %1 : vector<1x512xf32>
    %c0_3 = arith.constant 0 : index
    %c0_4 = arith.constant 0 : index
    %3 = vector.load %arg3[%c0_3, %c0_4] : memref<1x512xf32, #tpu.memory_space<vmem>>, vector<1x512xf32>
    tpu.vector_store %arg3[%c0_3, %c0_4], %2 {strides = array<i32>} : memref<1x512xf32, #tpu.memory_space<vmem>>, vector<1x512xf32>,
    return
  }
  func.func @transform_0(%arg0: i32) -> (i32, i32) {
    %c0_i32 = arith.constant 0 : i32
    %c0_i32_0 = arith.constant 0 : i32
    return %arg0, %c0_i32 : i32, i32
  }
  func.func @transform_1(%arg0: i32) -> (i32, i32) {
    %c0_i32 = arith.constant 0 : i32
    %c0_i32_0 = arith.constant 0 : i32
    return %arg0, %c0_i32 : i32, i32
  }
  func.func @transform_2(%arg0: i32) -> (i32, i32) {
    %c0_i32 = arith.constant 0 : i32
    %c0_i32_0 = arith.constant 0 : i32
    return %arg0, %c0_i32 : i32, i32
  }
}

</mosaic_0001>

<llo_original>
// kernel: tpu_custom_call.1
$region0: #{tpu_custom_call.1}
  #allocation0 [shape = 'u32[]', space=smem, size = 0x4, offset = 0x4, fixed_abs, tag = 'smem constant byte address 0x4 - core index']
  #allocation1 [shape = 'u32[144,128]{1,0:T(1,128)}', space=vmem, size = 0x12000, scoped, tag = 'internal scratch']
  %s0 = inlined_call_operand.hbm [shape: f32[1,512], index: 0, kind: input, shape index: {}]
  %s1 = inlined_call_operand.hbm [shape: f32[1,512], index: 1, kind: input, shape index: {}]
  %s2 = inlined_call_operand.hbm [shape: f32[1,512], index: 2, kind: output, shape index: {}]
  %s3 = sld [smem:[#allocation0]]
  $region26: #{tpu_custom_call.1} parent=0
    _
  %s5 = ssub.s32 1, %s3
  %s6 = scalar_select 0, %s5, %s3
  $region1: #{tpu_custom_call.1} parent=0
    #allocation2 [shape = 'u8[2048]{0}', space=vmem, size = 0x800, scoped, tag = 'input window, operand 0, single buffered']
    #allocation3 [shape = 's32[1]{0}', space=sflag, size = 0x4, scoped, tag = 'scoped memory for tpu_custom_call.1']
    #allocation4 [shape = 's32[1]{0}', space=sflag, size = 0x4, scoped, tag = 'scoped memory for tpu_custom_call.1']
    #allocation5 [shape = 'u8[2048]{0}', space=vmem, size = 0x800, scoped, tag = 'input window, operand 1, single buffered']
    #allocation6 [shape = 's32[1]{0}', space=sflag, size = 0x4, scoped, tag = 'scoped memory for tpu_custom_call.1']
    #allocation7 [shape = 'u8[2048]{0}', space=vmem, size = 0x800, scoped, tag = 'output window, operand 0, single buffered']
    %7 = vsyncpa [#allocation3], 0
    %8 = vsyncpa [#allocation6], 0
    %9 = vsyncpa [#allocation4], 0
    // Predicated region
    $region2: #{tpu_custom_call.1} parent=1 // pred_check
      _
    $region3: #{tpu_custom_call.1} parent=1 // pred_check_branch
      %11 = sbr.rel (0) target = $region5
    $region4: #{tpu_custom_call.1} parent=1 // pred_region
      %s13 = ssub.s32 64, 64
      %14 = vsyncadd [#allocation3], %s13
      %s16 = sshll.u32 [#allocation2], 4
      %s17 = int_to_ptr.vmem [resolvable:$true] %s16
      %19 = dma.hbm_to_vmem [thread:$0]  %s0, 64, %s17, [#allocation3]
    $region5: #{tpu_custom_call.1} parent=1 // pred_fallthru
      _
    // Predicated region
    $region6: #{tpu_custom_call.1} parent=1 // pred_check
      _
    $region7: #{tpu_custom_call.1} parent=1 // pred_check_branch
      %21 = sbr.rel (0) target = $region9
    $region8: #{tpu_custom_call.1} parent=1 // pred_region
      %s23 = ssub.s32 64, 64
      %24 = vsyncadd [#allocation6], %s23
      %s26 = sshll.u32 [#allocation5], 4
      %s27 = int_to_ptr.vmem [resolvable:$true] %s26
      %29 = dma.hbm_to_vmem [thread:$0]  %s1, 64, %s27, [#allocation6]
    $region9: #{tpu_custom_call.1} parent=1 // pred_fallthru
      _
    // Predicated region
    $region10: #{tpu_custom_call.1} parent=1 // pred_check
      _
    $region11: #{tpu_custom_call.1} parent=1 // pred_check_branch
      %31 = sbr.rel (0) target = $region13
    $region12: #{tpu_custom_call.1} parent=1 // pred_region
      %32 = dma.done [#allocation3], 64
    $region13: #{tpu_custom_call.1} parent=1 // pred_fallthru
      _
    // Predicated region
    $region14: #{tpu_custom_call.1} parent=1 // pred_check
      _
    $region15: #{tpu_custom_call.1} parent=1 // pred_check_branch
      %34 = sbr.rel (0) target = $region17
    $region16: #{tpu_custom_call.1} parent=1 // pred_region
      %35 = dma.done [#allocation6], 64
    $region17: #{tpu_custom_call.1} parent=1 // pred_fallthru
      _
    %v36 = vld [vmem:[#allocation2] sm:$0xf]
    %v37 = vld [vmem:[#allocation5] sm:$0xf]
    %v38 = vadd.f32 %v36, %v37
    %v39 = vlaneseq
    %vm40 = vcmp.ge.s32.totalorder %v39, 0
    %vm41 = vcmp.lt.s32.totalorder %v39, 512
    %vm42 = vmand %vm40, %vm41
    %43 = vst.msk [vmem:[#allocation7] sm:$0xf] %vm42, %v38
    // Predicated region
    $region18: #{tpu_custom_call.1} parent=1 // pred_check
      _
    $region19: #{tpu_custom_call.1} parent=1 // pred_check_branch
      %45 = sbr.rel (0) target = $region21
    $region20: #{tpu_custom_call.1} parent=1 // pred_region
      %s47 = ssub.s32 64, 64
      %48 = vsyncadd [#allocation4], %s47
      %s50 = sshll.u32 [#allocation7], 4
      %s51 = int_to_ptr.vmem [resolvable:$true] %s50
      %53 = dma.vmem_to_hbm [thread:$0]  %s51, 64, %s2, [#allocation4]
    $region21: #{tpu_custom_call.1} parent=1 // pred_fallthru
      _
    // Predicated region
    $region22: #{tpu_custom_call.1} parent=1 // pred_check
      _
    $region23: #{tpu_custom_call.1} parent=1 // pred_check_branch
      %55 = sbr.rel (0) target = $region25
    $region24: #{tpu_custom_call.1} parent=1 // pred_region
      %56 = dma.done [#allocation4], 64
    $region25: #{tpu_custom_call.1} parent=1 // pred_fallthru
      _
    %57 = vsyncpa [#allocation3], 1
    %58 = vsyncpa [#allocation6], 1
    %59 = vsyncpa [#allocation4], 1

</llo_original>
